<compile_context>
chip_gen: v7x
topology: tpu7x:2x2x1
jax: 0.10.0
libtpu: 0.0.40
codegen_flags: <defaults>
</compile_context>

<pallas_src>
import functools

import jax
import jax.numpy as jnp
from jax.experimental import pallas as pl
from jax.experimental.pallas import tpu as pltpu


class QuantizationMode:
    SYMMETRIC = "symmetric"
    ASYMMETRIC = "asymmetric"


class QuantizerConfig:
    def __init__(self, bits=8, mode=QuantizationMode.SYMMETRIC,
                 signedness_to_force=None, per_channel=False,
                 input_shape=None, is_weights=False):
        self.bits = bits
        self.mode = mode
        self.signedness_to_force = signedness_to_force
        self.per_channel = per_channel
        self.is_weights = is_weights
        self.input_shape = input_shape


# ----------------------------- Pallas kernel ------------------------------ #

_BLOCK_BYTES = 4 << 20          # ~4 MiB per block per buffer (in I/O-dtype bytes)
_SCALE_EPS = 1e-16              # NNCF-style guard against scale <= 0
_LANE_CANDIDATES = (4096, 2048, 1536, 1024, 768, 512, 384, 256, 128)


def _round_up(a, b):
    return (a + b - 1) // b * b


def _fake_quant_kernel(scale_ref, x_ref, o_ref, *, level_low, level_high):
    # scale_ref: (1,) f32 in SMEM.  x_ref / o_ref: (tm, lanes) VMEM tiles.
    s = jnp.maximum(scale_ref[0], _SCALE_EPS)       # eps guard (NNCF clamps scale)
    to_int = level_high / s                         # scalar divides: once per step
    to_fp = s / level_high
    x = x_ref[...].astype(jnp.float32)              # compute in f32 (v5e-safe VPU)
    # NOTE: jnp.round is round-half-to-even; matches the jnp reference below.
    q = jnp.clip(jnp.round(x * to_int), level_low, level_high)
    o_ref[...] = (q * to_fp).astype(o_ref.dtype)


def _choose_slab(total):
    """Pick a lane-dense (rows, lanes) slab that exactly tiles `total` if possible."""
    for lanes in _LANE_CANDIDATES:
        if total % lanes == 0:
            return total // lanes, lanes, 0
    # Truly ragged size (not a multiple of 128): pad the tail only.
    lanes = 1024 if total >= 1024 else 128
    rows = pl.cdiv(total, lanes)
    return rows, lanes, rows * lanes - total


@functools.partial(jax.jit, static_argnames=("bits", "narrow_range"))
def symmetric_fake_quantize(x, scale, *, bits=8, narrow_range=False):
    """Symmetric per-tensor fake-quantize of an arbitrary-shape float tensor."""
    orig_shape = x.shape
    orig_dtype = x.dtype
    total = x.size
    itemsize = jnp.dtype(orig_dtype).itemsize

    level_high = float(2 ** (bits - 1) - 1)                   # 127 for 8 bits
    level_low = -level_high if narrow_range else float(-(2 ** (bits - 1)))

    rows, lanes, pad = _choose_slab(total)

    x_flat = x.reshape(-1)
    if pad:
        # Only hit when total % 128 != 0 (rare for NN tensors); real copy.
        x_flat = jnp.pad(x_flat, (0, pad))
    x2 = x_flat.reshape(rows, lanes)

    # Row-block sizing:
    #  * respect the packed-dtype sublane minimum (8/16/32 for 32/16/8-bit),
    #  * target ~_BLOCK_BYTES per block in the I/O dtype,
    #  * keep >= ~8 grid steps so the DMA pipeline overlaps and v7x megacore
    #    shards real work across both TensorCores.
    sub_min = max(8, 32 // itemsize)
    if rows <= sub_min:
        tm = rows                                  # full-extent block (always legal)
    else:
        tm_target = max(sub_min,
                        (_BLOCK_BYTES // (lanes * itemsize)) // sub_min * sub_min)
        tm_cap = max(sub_min, _round_up(pl.cdiv(rows, 8), sub_min))
        tm = min(tm_target, tm_cap)
    n_blocks = pl.cdiv(rows, tm)                   # partial edge block is masked

    block_bytes = tm * lanes * itemsize
    # 2x input + 2x output double-buffered, plus slack; clamp to [16, 32] MiB.
    vmem_limit = int(min(32 << 20, max(16 << 20, 4 * block_bytes + (2 << 20))))

    scale_smem = jnp.asarray(scale, jnp.float32).reshape((1,))

    kernel = functools.partial(_fake_quant_kernel,
                               level_low=level_low, level_high=level_high)

    y2 = pl.pallas_call(
        kernel,
        out_shape=jax.ShapeDtypeStruct((rows, lanes), orig_dtype),
        grid_spec=pltpu.PrefetchScalarGridSpec(
            num_scalar_prefetch=0,
            grid=(n_blocks,),
            in_specs=[
                pl.BlockSpec(memory_space=pltpu.SMEM),         # scale scalar
                pl.BlockSpec((tm, lanes), lambda i: (i, 0)),   # x tile
            ],
            out_specs=pl.BlockSpec((tm, lanes), lambda i: (i, 0)),
        ),
        compiler_params=pltpu.CompilerParams(
            dimension_semantics=("parallel",),     # megacore sharding on v7x
            vmem_limit_bytes=vmem_limit,
        ),
    )(scale_smem, x2)

    if pad:
        return y2.reshape(-1)[:total].reshape(orig_shape)
    return y2.reshape(orig_shape)


# ----------------------------- Module wrapper ------------------------------ #

class BaseQuantizerPallas:
    """JAX/Pallas port of nncf BaseQuantizer's forward semantics."""

    def __init__(self, config: QuantizerConfig):
        self.config = config
        self.init_stage = False
        self.initialized = False
        self.call_count = 0
        self.scale_shape = 1
        # Deterministic parameter init (scale_shape == 1 -> scalar scale = 1.0).
        self.scale = jnp.ones((self.scale_shape,), dtype=jnp.float32)
        # TODO(synk): LoadStateListener / state_dict pre-hooks are checkpoint
        # machinery with no Pallas equivalent (no compute).

    def forward(self, x):
        self.call_count += 1                  # is_debug() counter equivalent
        if self.init_stage:
            return x                          # identity during init stage
        return self.quantize(x)

    def quantize(self, x):
        # Default concrete path: symmetric per-tensor fake-quant.
        # NNCF uses a narrow range (level_low = -level_high) for weight
        # quantizers; the default config (is_weights=False) keeps -2^(bits-1).
        return symmetric_fake_quantize(
            x, self.scale, bits=self.config.bits,
            narrow_range=bool(self.config.is_weights))

    def reset_call_counter(self):
        self.call_count = 0

    def get_trainable_params(self):
        return {"scale": self.scale}

    # TODO(synk): apply_minmax_init is abstract in the base class (statistics
    # initialization, not part of the forward pass).


# ----------------------------------- main ---------------------------------- #

if __name__ == "__main__":
    key = jax.random.PRNGKey(0)
    x = jax.random.normal(key, (2, 4, 16, 16), dtype=jnp.float32)  # NCHW

    quantizer = BaseQuantizerPallas(QuantizerConfig(bits=8,
                                                    mode=QuantizationMode.SYMMETRIC))
    y = jax.block_until_ready(quantizer.forward(x))

    # Reference check (pure jnp) of the symmetric fake-quant path.
    s, lh, ll = 1.0, 127.0, -128.0
    y_ref = jnp.clip(jnp.round(x / s * lh), ll, lh) * (s / lh)
    assert y.shape == x.shape and y.dtype == x.dtype
    assert float(jnp.max(jnp.abs(y - y_ref))) < 1e-5

    # Non-128-multiple size exercises the (rare) ragged pad/slice path.
    x_odd = jax.random.normal(jax.random.PRNGKey(1), (1, 3, 7, 7), jnp.float32)
    y_odd = jax.block_until_ready(quantizer.forward(x_odd))
    y_odd_ref = jnp.clip(jnp.round(x_odd / s * lh), ll, lh) * (s / lh)
    assert y_odd.shape == x_odd.shape
    assert float(jnp.max(jnp.abs(y_odd - y_odd_ref))) < 1e-5

    # 128-multiple size that does NOT tile the grid exactly (25 rows of 128):
    # exercises the no-pad partial-edge-block masking path.
    x_edge = jax.random.normal(jax.random.PRNGKey(2), (25, 128), jnp.float32)
    y_edge = jax.block_until_ready(quantizer.forward(x_edge))
    y_edge_ref = jnp.clip(jnp.round(x_edge / s * lh), ll, lh) * (s / lh)
    assert float(jnp.max(jnp.abs(y_edge - y_edge_ref))) < 1e-5

    # bf16 I/O path (compute stays f32 in-kernel, HBM traffic halves).
    x_bf16 = jax.random.normal(jax.random.PRNGKey(3), (16, 256),
                               jnp.float32).astype(jnp.bfloat16)
    y_bf16 = jax.block_until_ready(quantizer.forward(x_bf16))
    y_bf16_ref = (jnp.clip(jnp.round(x_bf16.astype(jnp.float32) / s * lh), ll, lh)
                  * (s / lh)).astype(jnp.bfloat16)
    assert y_bf16.shape == x_bf16.shape and y_bf16.dtype == jnp.bfloat16
    assert float(jnp.max(jnp.abs((y_bf16 - y_bf16_ref).astype(jnp.float32)))) < 1e-2

    # init_stage branch: pure pass-through.
    quantizer.init_stage = True
    y_id = jax.block_until_ready(quantizer.forward(x))
    assert jnp.array_equal(y_id, x)

    print("KERNEL_OK")
</pallas_src>

<mosaic_0001>
module attributes {stable_mosaic.version = 11 : i64} {
  func.func @_fake_quant_kernel(%arg0: i32, %arg1: memref<1xf32, #tpu.memory_space<smem>>, %arg2: memref<1x2048xf32, #tpu.memory_space<vmem>>, %arg3: memref<1x2048xf32, #tpu.memory_space<vmem>>) attributes {dimension_semantics = [#tpu.dimension_semantics<parallel>], iteration_bounds = array<i64: 1>, scalar_prefetch = 0 : i64, scratch_operands = 0 : i64, tpu.core_type = #tpu.core_type<tc>, window_params = [{transform_indices = @transform_0, window_bounds = array<i64: 1>}, {transform_indices = @transform_1, window_bounds = array<i64: 1, 2048>}, {transform_indices = @transform_2, window_bounds = array<i64: 1, 2048>}]} {
    %c0 = arith.constant 0 : index
    %0 = memref.load %arg1[%c0] : memref<1xf32, #tpu.memory_space<smem>>
    %cst = arith.constant 1.000000e-16 : f32
    %1 = arith.maximumf %0, %cst : f32
    %cst_0 = arith.constant 1.270000e+02 : f32
    %2 = arith.divf %cst_0, %1 : f32
    %cst_1 = arith.constant 1.270000e+02 : f32
    %3 = arith.divf %1, %cst_1 : f32
    %c0_2 = arith.constant 0 : index
    %c0_3 = arith.constant 0 : index
    %4 = vector.load %arg2[%c0_2, %c0_3] : memref<1x2048xf32, #tpu.memory_space<vmem>>, vector<1x2048xf32>
    %5 = vector.broadcast %2 : f32 to vector<1x2048xf32>
    %6 = arith.mulf %4, %5 : vector<1x2048xf32>
    %7 = math.roundeven %6 : vector<1x2048xf32>
    %cst_4 = arith.constant -1.280000e+02 : f32
    %cst_5 = arith.constant 1.270000e+02 : f32
    %8 = vector.broadcast %cst_4 : f32 to vector<1x2048xf32>
    %9 = arith.maximumf %8, %7 : vector<1x2048xf32>
    %10 = vector.broadcast %cst_5 : f32 to vector<1x2048xf32>
    %11 = arith.minimumf %10, %9 : vector<1x2048xf32>
    %12 = vector.broadcast %3 : f32 to vector<1x2048xf32>
    %13 = arith.mulf %11, %12 : vector<1x2048xf32>
    %c0_6 = arith.constant 0 : index
    %c0_7 = arith.constant 0 : index
    %14 = vector.load %arg3[%c0_6, %c0_7] : memref<1x2048xf32, #tpu.memory_space<vmem>>, vector<1x2048xf32>
    tpu.vector_store %arg3[%c0_6, %c0_7], %13 {strides = array<i32>} : memref<1x2048xf32, #tpu.memory_space<vmem>>, vector<1x2048xf32>,
    return
  }
  func.func @transform_0(%arg0: i32) -> i32 {
    %c0_i32 = arith.constant 0 : i32
    %c0_i32_0 = arith.constant 0 : i32
    return %c0_i32 : i32
  }
  func.func @transform_1(%arg0: i32) -> (i32, i32) {
    %c0_i32 = arith.constant 0 : i32
    %c0_i32_0 = arith.constant 0 : i32
    return %arg0, %c0_i32 : i32, i32
  }
  func.func @transform_2(%arg0: i32) -> (i32, i32) {
    %c0_i32 = arith.constant 0 : i32
    %c0_i32_0 = arith.constant 0 : i32
    return %arg0, %c0_i32 : i32, i32
  }
}

</mosaic_0001>

<llo_original>
// kernel: symmetric_fake_quantize.1
$region0: #{symmetric_fake_quantize.1}
  #allocation0 [shape = 'u32[]', space=smem, size = 0x4, offset = 0x4, fixed_abs, tag = 'smem constant byte address 0x4 - core index']
  #allocation1 [shape = 'u32[144,128]{1,0:T(1,128)}', space=vmem, size = 0x12000, scoped, tag = 'internal scratch']
  #allocation2 [shape = 'f32[1]{0:T(128)S(6)}', space=smem, size = 0x200, scoped, tag = 'scoped memory for symmetric_fake_quantize.1']
  %s0 = inlined_call_operand.<no memory space> [shape: f32[1], index: 0, kind: input, shape index: {}]
  %s1 = inlined_call_operand.vmem [shape: f32[1,2048], index: 1, kind: input, shape index: {}]
  %s2 = inlined_call_operand.vmem [shape: f32[1,2048], index: 2, kind: output, shape index: {}]
  %s3 = sld [smem:[#allocation0]]
  $region18: #{symmetric_fake_quantize.1} parent=0
    _
  %s5 = ssub.s32 1, %s3
  %s6 = scalar_select 0, %s5, %s3
  %7 = sst [smem:[#allocation2]] %s0
  // Predicated region
  $region2: #{symmetric_fake_quantize.1} parent=0 // pred_check
    _
  $region3: #{symmetric_fake_quantize.1} parent=0 // pred_check_branch
    %9 = sbr.rel (0) target = $region5
  $region4: #{symmetric_fake_quantize.1} parent=0 // pred_region
    _
  $region5: #{symmetric_fake_quantize.1} parent=0 // pred_fallthru
    _
  // Predicated region
  $region6: #{symmetric_fake_quantize.1} parent=0 // pred_check
    _
  $region7: #{symmetric_fake_quantize.1} parent=0 // pred_check_branch
    %11 = sbr.rel (0) target = $region9
  $region8: #{symmetric_fake_quantize.1} parent=0 // pred_region
    _
  $region9: #{symmetric_fake_quantize.1} parent=0 // pred_fallthru
    _
  %s12 = sld [smem:[#allocation2]]
  %s13 = smax.f32 %s12, 1e-16
  %v14 = vstv %s13
  %v15 = vrcp.pop %v14
  %s16 = vtos %v15
  %s17 = smul.f32 127.0, %s16
  %v18 = vrcp.pop 127.0
  %s19 = vtos %v18
  %s20 = smul.f32 %s13, %s19
  %v21 = vld [vmem:[%s1] sm:$0xff]
  %v22 = vld [vmem:[%s1 + $0x8] sm:$0xff]
  %v23 = vstv %s17
  %v24 = vmul.f32 %v21, %v23
  %v25 = vmul.f32 %v22, %v23
  %v26 = vround.ne.pseudo %v24
  %v27 = vround.ne.pseudo %v25
  %v28 = vmax.f32 %v26, -128.0
  %v29 = vmax.f32 %v27, -128.0
  %v30 = vmin.f32 %v28, 127.0
  %v31 = vmin.f32 %v29, 127.0
  %v32 = vstv %s20
  %v33 = vmul.f32 %v30, %v32
  %v34 = vmul.f32 %v31, %v32
  %35 = vst [vmem:[%s2] sm:$0xff] %v33
  %36 = vst [vmem:[%s2 + $0x8] sm:$0xff] %v34
  // Predicated region
  $region10: #{symmetric_fake_quantize.1} parent=0 // pred_check
    _
  $region11: #{symmetric_fake_quantize.1} parent=0 // pred_check_branch
    %38 = sbr.rel (0) target = $region13
  $region12: #{symmetric_fake_quantize.1} parent=0 // pred_region
    _
  $region13: #{symmetric_fake_quantize.1} parent=0 // pred_fallthru
    _
  // Predicated region
  $region14: #{symmetric_fake_quantize.1} parent=0 // pred_check
    _
  $region15: #{symmetric_fake_quantize.1} parent=0 // pred_check_branch
    %40 = sbr.rel (0) target = $region17
  $region16: #{symmetric_fake_quantize.1} parent=0 // pred_region
    _
  $region17: #{symmetric_fake_quantize.1} parent=0 // pred_fallthru
    _

</llo_original>
